<compile_context>
chip_gen: v7x
topology: tpu7x:2x2x1
jax: 0.10.0
libtpu: 0.0.40
codegen_flags: <defaults>
</compile_context>

<pallas_src>
import jax
import jax.numpy as jnp
from jax.experimental import pallas as pl
from jax.experimental.pallas import tpu as pltpu


def _round_up(x, m):
    return ((x + m - 1) // m) * m


# --------------------------- Pallas kernels ---------------------------------

def _stem_kernel(x_ref, w_ref, b_ref, o_ref):
    """Backbone stem: y = relu(W_eff @ x + b_eff), computed on the VPU.

    x: (C_in=3, TS) spatial tile, w: (C_out, C_in), b: (C_out, 1),
    o: (C_out, TS) bf16.  ImageNet normalization is pre-folded into w/b.
    """
    x = x_ref[...]
    w = w_ref[...]
    c_in = x.shape[0]
    acc = w[:, 0:1] * x[0:1, :]
    for c in range(1, c_in):                      # tiny static unroll (C_in = 3)
        acc = acc + w[:, c:c + 1] * x[c:c + 1, :]
    o_ref[...] = jnp.maximum(acc + b_ref[...], 0.0).astype(o_ref.dtype)


def _roipool_matmul_kernel(w_ref, f_ref, o_ref, acc_ref):
    """ROI-align as matmul: wb (tm, tk) @ feat^T (tk, c) -> (tm, c), K-tiled.

    feat stays in its native lane-dense (c, hw) layout; the small (c, tk)
    tile is transposed in-kernel (XLU slot, cheap) so no wrapper relayout of
    the feature map is needed.
    """
    k = pl.program_id(1)

    @pl.when(k == 0)
    def _():
        acc_ref[...] = jnp.zeros_like(acc_ref)

    acc_ref[...] += jnp.dot(w_ref[...], f_ref[...].T,
                            preferred_element_type=jnp.float32)

    @pl.when(k == pl.num_programs(1) - 1)
    def _():
        o_ref[...] = acc_ref[...]


def _topnet_kernel(x_ref, w6_ref, b6_ref, w7_ref, b7_ref, o_ref, acc_ref):
    """TwoMLPHead (fc6 -> ReLU -> fc7 -> ReLU), K-tiled fc6 contraction.

    Grid is (row tiles = parallel, K tiles = arbitrary).
    """
    k = pl.program_id(1)

    @pl.when(k == 0)
    def _():
        acc_ref[...] = jnp.zeros_like(acc_ref)

    acc_ref[...] += jnp.dot(x_ref[...], w6_ref[...],
                            preferred_element_type=jnp.float32)

    @pl.when(k == pl.num_programs(1) - 1)
    def _():
        h = jnp.maximum(acc_ref[...] + b6_ref[...], 0.0)
        o = jnp.dot(h.astype(w7_ref.dtype), w7_ref[...],
                    preferred_element_type=jnp.float32) + b7_ref[...]
        o_ref[...] = jnp.maximum(o, 0.0)


# --------------------------- kernel wrappers ---------------------------------

def stem_conv(image_chw, w_eff_t, b_eff, *, max_tile=2048):
    """Normalize + 1x1 conv + ReLU in (C, H*W) layout, tiled over space (bf16 out)."""
    c_in, h, w = image_chw.shape
    spatial = h * w
    x = image_chw.reshape(c_in, spatial)          # no transpose: free reshape
    c_out = w_eff_t.shape[0]
    # Fixed 128-aligned tile + cdiv grid: the remainder block (for real image
    # sizes where spatial % 128 != 0) is masked by Pallas instead of falling
    # back to one VMEM-blowing full-extent block.
    ts = spatial if spatial <= max_tile else max_tile - (max_tile % 128)
    out = pl.pallas_call(
        _stem_kernel,
        out_shape=jax.ShapeDtypeStruct((c_out, spatial), jnp.bfloat16),
        grid_spec=pltpu.PrefetchScalarGridSpec(
            num_scalar_prefetch=0,
            grid=(pl.cdiv(spatial, ts),),
            in_specs=[pl.BlockSpec((c_in, ts), lambda i: (0, i)),
                      pl.BlockSpec((c_out, c_in), lambda i: (0, 0)),
                      pl.BlockSpec((c_out, 1), lambda i: (0, 0))],
            out_specs=pl.BlockSpec((c_out, ts), lambda i: (0, i))),
        compiler_params=pltpu.CompilerParams(
            dimension_semantics=("parallel",),
            vmem_limit_bytes=32 * 1024 * 1024),
    )(x, w_eff_t, b_eff)
    return out.reshape(c_out, h, w)


def rescale_boxes(boxes, scales):
    """BaseSGGenerator._rescale_boxes: scales = (ratio_height, ratio_width)."""
    rh, rw = scales
    scale_vec = jnp.array([rw, rh, rw, rh], dtype=jnp.float32)
    return boxes.astype(jnp.float32) * scale_vec


def create_pred_boxes(subj_rois, obj_rois):
    """Union box of subject/object (SpatialFeatureExtractor.create_pred_boxes)."""
    lo = jnp.minimum(subj_rois[:, :2], obj_rois[:, :2])
    hi = jnp.maximum(subj_rois[:, 2:], obj_rois[:, 2:])
    return jnp.concatenate([lo, hi], axis=1)


def _bilinear_factors(coords, size, out_size):
    """Per-axis bilinear weights: coords (n, out) -> weights (n, out, size)."""
    cf = jnp.floor(coords)
    w1 = coords - cf
    w0 = 1.0 - w1
    i0 = jnp.clip(cf.astype(jnp.int32), 0, size - 1)
    i1 = jnp.clip(cf.astype(jnp.int32) + 1, 0, size - 1)
    return (jax.nn.one_hot(i0, size, dtype=jnp.float32) * w0[..., None]
            + jax.nn.one_hot(i1, size, dtype=jnp.float32) * w1[..., None])


def _build_bilinear_matrix(boxes, feat_h, feat_w, out_size, m_pad):
    """Separable bilinear-interpolation matrix, shape (m_pad, feat_h*feat_w) bf16.

    Built from O(m*(h+w)) one-hot factors combined in one outer product
    (no 4x one_hot(m, h*w) passes); one center sample per bin.
    """
    n = boxes.shape[0]
    boxes = boxes.astype(jnp.float32)
    x0, y0, x1, y1 = boxes[:, 0], boxes[:, 1], boxes[:, 2], boxes[:, 3]
    bw = (x1 - x0) / out_size
    bh = (y1 - y0) / out_size
    centers = jnp.arange(out_size, dtype=jnp.float32) + 0.5
    xs = x0[:, None] + centers[None, :] * bw[:, None]          # (n, out)
    ys = y0[:, None] + centers[None, :] * bh[:, None]          # (n, out)
    wy = _bilinear_factors(ys, feat_h, out_size)               # (n, out, h)
    wx = _bilinear_factors(xs, feat_w, out_size)               # (n, out, w)
    m = n * out_size * out_size
    wy_m = jnp.broadcast_to(wy[:, :, None, :],
                            (n, out_size, out_size, feat_h)).reshape(m, feat_h)
    wx_m = jnp.broadcast_to(wx[:, None, :, :],
                            (n, out_size, out_size, feat_w)).reshape(m, feat_w)
    if m_pad > m:
        wy_m = jnp.pad(wy_m, ((0, m_pad - m), (0, 0)))
        wx_m = jnp.pad(wx_m, ((0, m_pad - m), (0, 0)))
    wb = (wy_m[:, :, None] * wx_m[:, None, :]).astype(jnp.bfloat16)
    return wb.reshape(m_pad, feat_h * feat_w)


def roi_align_pallas(base_feat_chw, boxes, output_size, *, tm=128):
    """ROI align as a tiled MXU matmul.  Returns (n, out, out, c) f32.

    TODO(synk): torchvision MultiScaleRoIAlign selects an FPN level per box and
    uses sampling_ratio=2; here a single level, one sample per bin, expressed as
    an interpolation-matrix matmul (no scalarized gathers).
    """
    c, h, w = base_feat_chw.shape
    hw = h * w
    feat = base_feat_chw.reshape(c, hw)                        # bf16, free reshape
    n = boxes.shape[0]
    m = n * output_size * output_size
    m_pad = _round_up(m, tm)                                   # sublane/MXU-M aligned
    tk = min(512, _round_up(hw, 128))
    hw_pad = _round_up(hw, tk)
    wb = _build_bilinear_matrix(boxes, h, w, output_size, m_pad)   # (m_pad, hw) bf16
    if hw_pad != hw:
        wb = jnp.pad(wb, ((0, 0), (0, hw_pad - hw)))
        feat = jnp.pad(feat, ((0, 0), (0, hw_pad - hw)))
    pooled = pl.pallas_call(
        _roipool_matmul_kernel,
        out_shape=jax.ShapeDtypeStruct((m_pad, c), jnp.float32),
        grid_spec=pltpu.PrefetchScalarGridSpec(
            num_scalar_prefetch=0,
            grid=(m_pad // tm, hw_pad // tk),
            in_specs=[pl.BlockSpec((tm, tk), lambda i, k: (i, k)),
                      pl.BlockSpec((c, tk), lambda i, k: (0, k))],
            out_specs=pl.BlockSpec((tm, c), lambda i, k: (i, 0)),
            scratch_shapes=[pltpu.VMEM((tm, c), jnp.float32)]),
        compiler_params=pltpu.CompilerParams(
            dimension_semantics=("parallel", "arbitrary"),
            vmem_limit_bytes=32 * 1024 * 1024),
    )(wb, feat)
    return pooled[:m].reshape(n, output_size, output_size, c)


def top_net(x, params, hidden, tk):
    """fc6 -> ReLU -> fc7 -> ReLU with K-tiled contraction, bf16 weights."""
    w6, b6, w7, b7 = params            # pre-padded: (kpad,hp) bf16, (1,hp) f32, ...
    n, in_dim = x.shape
    kpad, hp = w6.shape
    n_pad = _round_up(max(n, 1), 8)                            # full sublane tiles
    row_tile = min(n_pad, 128)
    if n_pad % row_tile:
        row_tile = 8
    xp = jnp.zeros((n_pad, kpad), jnp.bfloat16).at[:n, :in_dim].set(
        x.astype(jnp.bfloat16))
    out = pl.pallas_call(
        _topnet_kernel,
        out_shape=jax.ShapeDtypeStruct((n_pad, hp), jnp.float32),
        grid_spec=pltpu.PrefetchScalarGridSpec(
            num_scalar_prefetch=0,
            grid=(n_pad // row_tile, kpad // tk),
            in_specs=[pl.BlockSpec((row_tile, tk), lambda i, k: (i, k)),
                      pl.BlockSpec((tk, hp), lambda i, k: (k, 0)),
                      pl.BlockSpec((1, hp), lambda i, k: (0, 0)),
                      pl.BlockSpec((hp, hp), lambda i, k: (0, 0)),
                      pl.BlockSpec((1, hp), lambda i, k: (0, 0))],
            out_specs=pl.BlockSpec((row_tile, hp), lambda i, k: (i, 0)),
            scratch_shapes=[pltpu.VMEM((row_tile, hp), jnp.float32)]),
        compiler_params=pltpu.CompilerParams(
            dimension_semantics=("parallel", "arbitrary"),
            vmem_limit_bytes=32 * 1024 * 1024),
    )(xp, w6, b6, w7, b7)
    return out[:n, :hidden]


def obj_binary_masks(boxes, *, im_width, im_height, mask_size):
    """Object binary masks in plain XLA (tiny op: launch cost > compute)."""
    boxes = boxes.astype(jnp.float32)
    sx = mask_size / im_width
    sy = mask_size / im_height
    x0 = jnp.floor(boxes[:, 0] * sx)[:, None, None]
    y0 = jnp.floor(boxes[:, 1] * sy)[:, None, None]
    x1 = jnp.ceil(boxes[:, 2] * sx)[:, None, None]
    y1 = jnp.ceil(boxes[:, 3] * sy)[:, None, None]
    ys = jnp.arange(mask_size, dtype=jnp.float32)[None, :, None]
    xs = jnp.arange(mask_size, dtype=jnp.float32)[None, None, :]
    inside = (xs >= x0) & (xs < x1) & (ys >= y0) & (ys < y1)
    return inside.astype(jnp.float32)                          # (n, mask, mask)


# --------------------------- the module --------------------------------------

class BaseSGGeneratorPallas:
    """JAX/Pallas port of BaseSGGenerator's forward pass (synthetic weights)."""

    def __init__(self, num_obj_classes, num_rel_classes, rel_batch_size,
                 feat_channels=16, hidden=32, mask_size=16, top_k_tile=128,
                 features=("base_features", "pool_features", "roi_features",
                           "object_1hots", "object_masks")):
        self.num_obj_classes = num_obj_classes
        self.num_rel_classes = num_rel_classes
        self.rel_batch_size = rel_batch_size
        self.features = set(features)
        self._mask_size = mask_size
        self.feat_channels = feat_channels
        self.hidden = hidden
        self._top_tk = top_k_tile

        key = jax.random.PRNGKey(0)
        keys = jax.random.split(key, 10)

        # GeneralizedRCNNTransform normalization constants (ImageNet), folded
        # into the stem weights/bias (zero runtime cost).
        mean = jnp.array([0.485, 0.456, 0.406], jnp.float32)
        std = jnp.array([0.229, 0.224, 0.225], jnp.float32)
        # TODO(synk): resnet50-FPN backbone replaced by a single Pallas 1x1-conv stem.
        w_stem = 0.1 * jax.random.normal(keys[0], (3, feat_channels), jnp.float32)
        b_stem = 0.01 * jax.random.normal(keys[1], (feat_channels,), jnp.float32)
        w_eff = w_stem / std[:, None]                          # (3, C_out)
        b_eff = b_stem - (mean / std) @ w_stem                 # (C_out,)
        self.w_stem_eff_t = jnp.asarray(w_eff.T)               # (C_out, 3)
        self.b_stem_eff = b_eff.reshape(feat_channels, 1)      # (C_out, 1)

        # TODO(synk): pooled features are flattened in (y, x, c) order here vs
        # PyTorch's (c, y, x); weights are synthetic so the nets are equivalent.
        in_dim = feat_channels * 7 * 7
        kpad = _round_up(in_dim, top_k_tile)                   # 784 -> 896 (not 1024)
        hp = max(128, _round_up(hidden, 128))                  # lane-dense hidden

        def mlp(k0, k1, k2, k3):
            w6 = 0.05 * jax.random.normal(k0, (in_dim, hidden), jnp.float32)
            b6 = 0.01 * jax.random.normal(k1, (1, hidden), jnp.float32)
            w7 = 0.05 * jax.random.normal(k2, (hidden, hidden), jnp.float32)
            b7 = 0.01 * jax.random.normal(k3, (1, hidden), jnp.float32)
            w6p = jnp.zeros((kpad, hp), jnp.bfloat16).at[:in_dim, :hidden].set(
                w6.astype(jnp.bfloat16))
            b6p = jnp.zeros((1, hp), jnp.float32).at[:, :hidden].set(b6)
            w7p = jnp.zeros((hp, hp), jnp.bfloat16).at[:hidden, :hidden].set(
                w7.astype(jnp.bfloat16))
            b7p = jnp.zeros((1, hp), jnp.float32).at[:, :hidden].set(b7)
            return (w6p, b6p, w7p, b7p)

        self.obj_top_net = mlp(*keys[2:6])     # deepcopy(fc6,ReLU,fc7,ReLU) analogue
        self.pred_top_net = mlp(*keys[6:10])
        self._box_scales = (1.0, 1.0)
        # TODO(synk): obj2vec / pred2vec / probabilities require JSON file I/O; omitted.

    # ---- feature extraction ----

    @staticmethod
    def _compute_scales(orig_shape, new_shape):
        return [ndim / odim for ndim, odim in zip(new_shape, orig_shape)]

    def get_base_features(self, image):
        orig_shape = image.shape[-2:]
        # TODO(synk): transform resize is skipped (scale factor 1.0).
        self._img_shape = orig_shape
        self._box_scales = self._compute_scales(orig_shape, self._img_shape)
        return stem_conv(image, self.w_stem_eff_t, self.b_stem_eff)   # bf16 (C,H,W)

    def get_obj_pooled_features(self, base_features, rois):
        rois = rescale_boxes(rois, self._box_scales)
        pooled = roi_align_pallas(base_features, rois, 7)       # (n, 7, 7, C)
        flat = pooled.reshape(pooled.shape[0], -1)              # free reshape
        return top_net(flat, self.obj_top_net, self.hidden, self._top_tk)

    def get_pred_pooled_features(self, base_features, subj_rois, obj_rois):
        subj = rescale_boxes(subj_rois, self._box_scales)
        obj = rescale_boxes(obj_rois, self._box_scales)
        rois = create_pred_boxes(subj, obj)
        pooled = roi_align_pallas(base_features, rois, 7)
        flat = pooled.reshape(pooled.shape[0], -1)
        return top_net(flat, self.pred_top_net, self.hidden, self._top_tk)

    def get_roi_features(self, base_features, rois, rois2=None):
        rois = rescale_boxes(rois, self._box_scales)
        if rois2 is not None:
            rois2 = rescale_boxes(rois2, self._box_scales)
            rois = create_pred_boxes(rois, rois2)
        pooled = roi_align_pallas(base_features, rois, 14)       # (n, 14, 14, C)
        return pooled.transpose(0, 3, 1, 2)                      # (n, C, 14, 14) as in torch

    def get_obj_1hot_vectors(self, object_ids):
        # tiny op: plain XLA one-hot (a pallas_call launch would cost more).
        return jax.nn.one_hot(object_ids.astype(jnp.int32),
                              self.num_obj_classes, dtype=jnp.float32)

    def get_obj_masks(self, object_boxes, mask_size=None):
        m = self._mask_size if mask_size is None else mask_size
        # image_info is (im_width, im_height), matching the PyTorch module.
        return obj_binary_masks(object_boxes,
                                im_width=self._image_info[0],
                                im_height=self._image_info[1],
                                mask_size=m)

    # ---- base-class hooks ----

    @staticmethod
    def contextualize(objects, base_features):
        return objects

    def net_forward(self, base_features, objects, pairs):
        # Base class's net_forward is abstract (returns ([], [])); this minimal
        # concrete version gathers per-pair subject/object features so the
        # output concat is meaningful.
        subj, obj = pairs[:, 0], pairs[:, 1]
        pf, oh = objects["pool_features"], objects["1hots"]
        pair_pool = jnp.concatenate([pf[subj], pf[obj]], axis=1)
        pair_1hot = jnp.concatenate([oh[subj], oh[obj]], axis=1)
        return (pair_pool, pair_1hot)

    # ---- forward ----

    def forward(self, image, object_boxes, object_ids, pairs, image_info):
        self._image_info = image_info
        base_features = None
        need_base = ("base_features" in self.features
                     or "pool_features" in self.features
                     or "roi_features" in self.features)
        if need_base:
            base_features = self.get_base_features(image)
        objects = {"boxes": object_boxes, "ids": object_ids}
        if "pool_features" in self.features:
            objects["pool_features"] = self.get_obj_pooled_features(
                base_features, object_boxes)
        if "roi_features" in self.features:
            objects["roi_features"] = self.get_roi_features(base_features, object_boxes)
        if "object_1hots" in self.features:
            objects["1hots"] = self.get_obj_1hot_vectors(object_ids)
        if "object_masks" in self.features:
            objects["masks"] = self.get_obj_masks(object_boxes)
        objects = self.contextualize(objects, base_features)
        self._objects = objects

        # Single fused pass over all pairs: concatenating per-rel_batch_size
        # chunks is row-wise identical; the eager-PyTorch memory-saving loop
        # only multiplies dispatch/gather overhead in JAX.
        out = self.net_forward(base_features, objects, pairs)
        return [out[k] if out[k] is not None else None for k in range(len(out))]


# --------------------------- demo ---------------------------------------------

if __name__ == "__main__":
    key = jax.random.PRNGKey(0)
    k1, k2, k3, k4 = jax.random.split(key, 4)

    H = W = 32            # spatial = 1024
    n_obj = 5
    n_rel = 7
    num_obj_classes = 10

    image = jax.random.uniform(k1, (3, H, W), jnp.float32)
    lo = jax.random.uniform(k2, (n_obj, 2), jnp.float32, 0.0, W / 2)
    hi = jnp.minimum(lo + jax.random.uniform(k3, (n_obj, 2), jnp.float32, 2.0, W / 2),
                     float(W) - 1e-3)
    object_boxes = jnp.concatenate([lo, hi], axis=1)              # (xmin, ymin, xmax, ymax)
    object_ids = jax.random.randint(k4, (n_obj,), 0, num_obj_classes)
    pairs = jnp.array([[i % n_obj, (i + 1) % n_obj] for i in range(n_rel)], jnp.int32)

    model = BaseSGGeneratorPallas(num_obj_classes=num_obj_classes, num_rel_classes=6,
                                  rel_batch_size=4, feat_channels=16, hidden=32,
                                  mask_size=16)
    outputs = model.forward(image, object_boxes, object_ids, pairs, (W, H))

    jax.block_until_ready(outputs)
    jax.block_until_ready(model._objects)
    assert outputs[0].shape == (n_rel, 2 * model.hidden)
    assert outputs[1].shape == (n_rel, 2 * num_obj_classes)
    assert model._objects["roi_features"].shape == (n_obj, model.feat_channels, 14, 14)
    assert model._objects["masks"].shape == (n_obj, model._mask_size, model._mask_size)
    print("KERNEL_OK")
</pallas_src>

<mosaic_0001>
module attributes {stable_mosaic.version = 11 : i64} {
  func.func @_stem_kernel(%arg0: i32, %arg1: memref<3x1024xf32, #tpu.memory_space<vmem>>, %arg2: memref<16x3xf32, #tpu.memory_space<vmem>>, %arg3: memref<16x1xf32, #tpu.memory_space<vmem>>, %arg4: memref<16x1024xbf16, #tpu.memory_space<vmem>>) attributes {dimension_semantics = [#tpu.dimension_semantics<parallel>], iteration_bounds = array<i64: 1>, scalar_prefetch = 0 : i64, scratch_operands = 0 : i64, tpu.core_type = #tpu.core_type<tc>, window_params = [{transform_indices = @transform_0, window_bounds = array<i64: 3, 1024>}, {pipeline_mode = #tpu.pipeline_mode<synchronous>, transform_indices = @transform_1, window_bounds = array<i64: 16, 3>}, {pipeline_mode = #tpu.pipeline_mode<synchronous>, transform_indices = @transform_2, window_bounds = array<i64: 16, 1>}, {transform_indices = @transform_3, window_bounds = array<i64: 16, 1024>}]} {
    %c0 = arith.constant 0 : index
    %c0_0 = arith.constant 0 : index
    %0 = vector.load %arg1[%c0, %c0_0] : memref<3x1024xf32, #tpu.memory_space<vmem>>, vector<3x1024xf32>
    %c0_1 = arith.constant 0 : index
    %c0_2 = arith.constant 0 : index
    %1 = vector.load %arg2[%c0_1, %c0_2] : memref<16x3xf32, #tpu.memory_space<vmem>>, vector<16x3xf32>
    %2 = vector.extract_strided_slice %1 {offsets = [0, 0], sizes = [16, 1], strides = [1, 1]} : vector<16x3xf32> to vector<16x1xf32>
    %3 = vector.extract_strided_slice %0 {offsets = [0, 0], sizes = [1, 1024], strides = [1, 1]} : vector<3x1024xf32> to vector<1x1024xf32>
    %4 = vector.broadcast %2 : vector<16x1xf32> to vector<16x1024xf32>
    %5 = vector.broadcast %3 : vector<1x1024xf32> to vector<16x1024xf32>
    %6 = arith.mulf %4, %5 : vector<16x1024xf32>
    %7 = vector.extract_strided_slice %1 {offsets = [0, 1], sizes = [16, 1], strides = [1, 1]} : vector<16x3xf32> to vector<16x1xf32>
    %8 = vector.extract_strided_slice %0 {offsets = [1, 0], sizes = [1, 1024], strides = [1, 1]} : vector<3x1024xf32> to vector<1x1024xf32>
    %9 = vector.broadcast %7 : vector<16x1xf32> to vector<16x1024xf32>
    %10 = vector.broadcast %8 : vector<1x1024xf32> to vector<16x1024xf32>
    %11 = arith.mulf %9, %10 : vector<16x1024xf32>
    %12 = arith.addf %6, %11 : vector<16x1024xf32>
    %13 = vector.extract_strided_slice %1 {offsets = [0, 2], sizes = [16, 1], strides = [1, 1]} : vector<16x3xf32> to vector<16x1xf32>
    %14 = vector.extract_strided_slice %0 {offsets = [2, 0], sizes = [1, 1024], strides = [1, 1]} : vector<3x1024xf32> to vector<1x1024xf32>
    %15 = vector.broadcast %13 : vector<16x1xf32> to vector<16x1024xf32>
    %16 = vector.broadcast %14 : vector<1x1024xf32> to vector<16x1024xf32>
    %17 = arith.mulf %15, %16 : vector<16x1024xf32>
    %18 = arith.addf %12, %17 : vector<16x1024xf32>
    %c0_3 = arith.constant 0 : index
    %c0_4 = arith.constant 0 : index
    %19 = vector.load %arg3[%c0_3, %c0_4] : memref<16x1xf32, #tpu.memory_space<vmem>>, vector<16x1xf32>
    %20 = vector.broadcast %19 : vector<16x1xf32> to vector<16x1024xf32>
    %21 = arith.addf %18, %20 : vector<16x1024xf32>
    %cst = arith.constant 0.000000e+00 : f32
    %22 = vector.broadcast %cst : f32 to vector<16x1024xf32>
    %23 = arith.maximumf %21, %22 : vector<16x1024xf32>
    %24 = arith.truncf %23 : vector<16x1024xf32> to vector<16x1024xbf16>
    %c0_5 = arith.constant 0 : index
    %c0_6 = arith.constant 0 : index
    %25 = vector.load %arg4[%c0_5, %c0_6] : memref<16x1024xbf16, #tpu.memory_space<vmem>>, vector<16x1024xbf16>
    tpu.vector_store %arg4[%c0_5, %c0_6], %24 {strides = array<i32>} : memref<16x1024xbf16, #tpu.memory_space<vmem>>, vector<16x1024xbf16>,
    return
  }
  func.func @transform_0(%arg0: i32) -> (i32, i32) {
    %c0_i32 = arith.constant 0 : i32
    %c0_i32_0 = arith.constant 0 : i32
    return %c0_i32, %arg0 : i32, i32
  }
  func.func @transform_1(%arg0: i32) -> (i32, i32) {
    %c0_i32 = arith.constant 0 : i32
    %c0_i32_0 = arith.constant 0 : i32
    %c0_i32_1 = arith.constant 0 : i32
    return %c0_i32, %c0_i32_0 : i32, i32
  }
  func.func @transform_2(%arg0: i32) -> (i32, i32) {
    %c0_i32 = arith.constant 0 : i32
    %c0_i32_0 = arith.constant 0 : i32
    %c0_i32_1 = arith.constant 0 : i32
    return %c0_i32, %c0_i32_0 : i32, i32
  }
  func.func @transform_3(%arg0: i32) -> (i32, i32) {
    %c0_i32 = arith.constant 0 : i32
    %c0_i32_0 = arith.constant 0 : i32
    return %c0_i32, %arg0 : i32, i32
  }
}

</mosaic_0001>

<llo_original>
// kernel: tpu_custom_call.1
$region0: #{tpu_custom_call.1}
  #allocation0 [shape = 'u32[]', space=smem, size = 0x4, offset = 0x4, fixed_abs, tag = 'smem constant byte address 0x4 - core index']
  #allocation1 [shape = 'u32[144,128]{1,0:T(1,128)}', space=vmem, size = 0x12000, scoped, tag = 'internal scratch']
  %s0 = inlined_call_operand.vmem [shape: f32[3,1024], index: 0, kind: input, shape index: {}]
  %s1 = inlined_call_operand.vmem [shape: f32[16,3], index: 1, kind: input, shape index: {}]
  %s2 = inlined_call_operand.vmem [shape: f32[16,1], index: 2, kind: input, shape index: {}]
  %s3 = inlined_call_operand.hbm [shape: bf16[16,1024], index: 3, kind: output, shape index: {}]
  %s4 = sld [smem:[#allocation0]]
  $region22: #{tpu_custom_call.1} parent=0
    _
  %s6 = ssub.s32 1, %s4
  %s7 = scalar_select 0, %s6, %s4
  $region1: #{tpu_custom_call.1} parent=0
    #allocation2 [shape = 'u8[32768]{0}', space=vmem, size = 0x8000, scoped, tag = 'output window, operand 0, single buffered']
    #allocation3 [shape = 's32[1]{0}', space=sflag, size = 0x4, scoped, tag = 'scoped memory for tpu_custom_call.1']
    %8 = vsyncpa [#allocation3], 0
    // Predicated region
    $region2: #{tpu_custom_call.1} parent=1 // pred_check
      _
    $region3: #{tpu_custom_call.1} parent=1 // pred_check_branch
      %10 = sbr.rel (0) target = $region5
    $region4: #{tpu_custom_call.1} parent=1 // pred_region
      _
    $region5: #{tpu_custom_call.1} parent=1 // pred_fallthru
      _
    // Predicated region
    $region6: #{tpu_custom_call.1} parent=1 // pred_check
      _
    $region7: #{tpu_custom_call.1} parent=1 // pred_check_branch
      %12 = sbr.rel (0) target = $region9
    $region8: #{tpu_custom_call.1} parent=1 // pred_region
      _
    $region9: #{tpu_custom_call.1} parent=1 // pred_fallthru
      _
    // Predicated region
    $region10: #{tpu_custom_call.1} parent=1 // pred_check
      _
    $region11: #{tpu_custom_call.1} parent=1 // pred_check_branch
      %14 = sbr.rel (0) target = $region13
    $region12: #{tpu_custom_call.1} parent=1 // pred_region
      _
    $region13: #{tpu_custom_call.1} parent=1 // pred_fallthru
      _
    %v15 = vld [vmem:[%s0] sm:$0x77]
    %v16 = vld [vmem:[%s0 + $0x8] sm:$0x77]
    %v17 = vld [vmem:[%s0 + $0x10] sm:$0x77]
    %v18 = vld [vmem:[%s0 + $0x18] sm:$0x77]
    %v19 = vld [vmem:[%s1] sm:$0xff]
    %v20 = vld [vmem:[%s1 + $0x8] sm:$0xff]
    %22 = vset.pattern.permute.xlu0 0
    %23 = vperm.xlu0 %22, %v19
    %v24 = vpop.permute.xlu0 %23
    %27 = vset.pattern.permute.xlu0 0
    %28 = vperm.xlu0 %27, %v20
    %v29 = vpop.permute.xlu0 %28
    %v35 = vlaneseq
    %v36 = vshrl.u32 %v35, 7
    %v37 = vsub.s32 0, %v36
    %v38 = vrot.slane %v15, %v37
    %v39 = vlaneseq
    %v40 = vshrl.u32 %v39, 7
    %v41 = vsub.s32 4, %v40
    %v42 = vrot.slane %v15, %v41
    %v43 = vlaneseq
    %v44 = vshrl.u32 %v43, 7
    %v45 = vsub.s32 0, %v44
    %v46 = vrot.slane %v16, %v45
    %v47 = vlaneseq
    %v48 = vshrl.u32 %v47, 7
    %v49 = vsub.s32 4, %v48
    %v50 = vrot.slane %v16, %v49
    %v51 = vlaneseq
    %v52 = vshrl.u32 %v51, 7
    %v53 = vsub.s32 0, %v52
    %v54 = vrot.slane %v17, %v53
    %v55 = vlaneseq
    %v56 = vshrl.u32 %v55, 7
    %v57 = vsub.s32 4, %v56
    %v58 = vrot.slane %v17, %v57
    %v59 = vlaneseq
    %v60 = vshrl.u32 %v59, 7
    %v61 = vsub.s32 0, %v60
    %v62 = vrot.slane %v18, %v61
    %v63 = vlaneseq
    %v64 = vshrl.u32 %v63, 7
    %v65 = vsub.s32 4, %v64
    %v66 = vrot.slane %v18, %v65
    %v75 = vlaneseq
    %v76 = vshrl.u32 %v75, 7
    %v77 = vsub.s32 0, %v76
    %v78 = vrot.slane %v38, %v77
    %v79 = vlaneseq
    %v80 = vshrl.u32 %v79, 7
    %v81 = vsub.s32 0, %v80
    %v82 = vrot.slane %v42, %v81
    %v83 = vlaneseq
    %v84 = vshrl.u32 %v83, 7
    %v85 = vsub.s32 0, %v84
    %v86 = vrot.slane %v46, %v85
    %v87 = vlaneseq
    %v88 = vshrl.u32 %v87, 7
    %v89 = vsub.s32 0, %v88
    %v90 = vrot.slane %v50, %v89
    %v91 = vlaneseq
    %v92 = vshrl.u32 %v91, 7
    %v93 = vsub.s32 0, %v92
    %v94 = vrot.slane %v54, %v93
    %v95 = vlaneseq
    %v96 = vshrl.u32 %v95, 7
    %v97 = vsub.s32 0, %v96
    %v98 = vrot.slane %v58, %v97
    %v99 = vlaneseq
    %v100 = vshrl.u32 %v99, 7
    %v101 = vsub.s32 0, %v100
    %v102 = vrot.slane %v62, %v101
    %v103 = vlaneseq
    %v104 = vshrl.u32 %v103, 7
    %v105 = vsub.s32 0, %v104
    %v106 = vrot.slane %v66, %v105
    %v107 = vmul.f32 %v24, %v78
    %v108 = vmul.f32 %v24, %v82
    %v109 = vmul.f32 %v24, %v86
    %v110 = vmul.f32 %v24, %v90
    %v111 = vmul.f32 %v24, %v94
    %v112 = vmul.f32 %v24, %v98
    %v113 = vmul.f32 %v24, %v102
    %v114 = vmul.f32 %v24, %v106
    %v115 = vmul.f32 %v29, %v78
    %v116 = vmul.f32 %v29, %v82
    %v117 = vmul.f32 %v29, %v86
    %v118 = vmul.f32 %v29, %v90
    %v119 = vmul.f32 %v29, %v94
    %v120 = vmul.f32 %v29, %v98
    %v121 = vmul.f32 %v29, %v102
    %v122 = vmul.f32 %v29, %v106
    %123 = vset.pattern.permute.xlu0 1
    %124 = vperm.xlu0 %123, %v19
    %v125 = vpop.permute.xlu0 %124
    %127 = vset.pattern.permute.xlu0 1
    %128 = vperm.xlu0 %127, %v20
    %v129 = vpop.permute.xlu0 %128
    %v131 = vlaneseq
    %v132 = vshrl.u32 %v131, 7
    %v133 = vsub.s32 1, %v132
    %v134 = vrot.slane %v15, %v133
    %v135 = vlaneseq
    %v136 = vshrl.u32 %v135, 7
    %v137 = vsub.s32 5, %v136
    %v138 = vrot.slane %v15, %v137
    %v139 = vlaneseq
    %v140 = vshrl.u32 %v139, 7
    %v141 = vsub.s32 1, %v140
    %v142 = vrot.slane %v16, %v141
    %v143 = vlaneseq
    %v144 = vshrl.u32 %v143, 7
    %v145 = vsub.s32 5, %v144
    %v146 = vrot.slane %v16, %v145
    %v147 = vlaneseq
    %v148 = vshrl.u32 %v147, 7
    %v149 = vsub.s32 1, %v148
    %v150 = vrot.slane %v17, %v149
    %v151 = vlaneseq
    %v152 = vshrl.u32 %v151, 7
    %v153 = vsub.s32 5, %v152
    %v154 = vrot.slane %v17, %v153
    %v155 = vlaneseq
    %v156 = vshrl.u32 %v155, 7
    %v157 = vsub.s32 1, %v156
    %v158 = vrot.slane %v18, %v157
    %v159 = vlaneseq
    %v160 = vshrl.u32 %v159, 7
    %v161 = vsub.s32 5, %v160
    %v162 = vrot.slane %v18, %v161
    %v171 = vlaneseq
    %v172 = vshrl.u32 %v171, 7
    %v173 = vsub.s32 1, %v172
    %v174 = vrot.slane %v134, %v173
    %v175 = vlaneseq
    %v176 = vshrl.u32 %v175, 7
    %v177 = vsub.s32 1, %v176
    %v178 = vrot.slane %v138, %v177
    %v179 = vlaneseq
    %v180 = vshrl.u32 %v179, 7
    %v181 = vsub.s32 1, %v180
    %v182 = vrot.slane %v142, %v181
    %v183 = vlaneseq
    %v184 = vshrl.u32 %v183, 7
    %v185 = vsub.s32 1, %v184
    %v186 = vrot.slane %v146, %v185
    %v187 = vlaneseq
    %v188 = vshrl.u32 %v187, 7
    %v189 = vsub.s32 1, %v188
    %v190 = vrot.slane %v150, %v189
    %v191 = vlaneseq
    %v192 = vshrl.u32 %v191, 7
    %v193 = vsub.s32 1, %v192
    %v194 = vrot.slane %v154, %v193
    %v195 = vlaneseq
    %v196 = vshrl.u32 %v195, 7
    %v197 = vsub.s32 1, %v196
    %v198 = vrot.slane %v158, %v197
    %v199 = vlaneseq
    %v200 = vshrl.u32 %v199, 7
    %v201 = vsub.s32 1, %v200
    %v202 = vrot.slane %v162, %v201
    %v203 = vmul.f32 %v125, %v174
    %v204 = vmul.f32 %v125, %v178
    %v205 = vmul.f32 %v125, %v182
    %v206 = vmul.f32 %v125, %v186
    %v207 = vmul.f32 %v125, %v190
    %v208 = vmul.f32 %v125, %v194
    %v209 = vmul.f32 %v125, %v198
    %v210 = vmul.f32 %v125, %v202
    %v211 = vmul.f32 %v129, %v174
    %v212 = vmul.f32 %v129, %v178
    %v213 = vmul.f32 %v129, %v182
    %v214 = vmul.f32 %v129, %v186
    %v215 = vmul.f32 %v129, %v190
    %v216 = vmul.f32 %v129, %v194
    %v217 = vmul.f32 %v129, %v198
    %v218 = vmul.f32 %v129, %v202
    %v219 = vadd.f32 %v107, %v203
    %v220 = vadd.f32 %v108, %v204
    %v221 = vadd.f32 %v109, %v205
    %v222 = vadd.f32 %v110, %v206
    %v223 = vadd.f32 %v111, %v207
    %v224 = vadd.f32 %v112, %v208
    %v225 = vadd.f32 %v113, %v209
    %v226 = vadd.f32 %v114, %v210
    %v227 = vadd.f32 %v115, %v211
    %v228 = vadd.f32 %v116, %v212
    %v229 = vadd.f32 %v117, %v213
    %v230 = vadd.f32 %v118, %v214
    %v231 = vadd.f32 %v119, %v215
    %v232 = vadd.f32 %v120, %v216
    %v233 = vadd.f32 %v121, %v217
    %v234 = vadd.f32 %v122, %v218
    %235 = vset.pattern.permute.xlu0 2
    %236 = vperm.xlu0 %235, %v19
    %v237 = vpop.permute.xlu0 %236
    %239 = vset.pattern.permute.xlu0 2
    %240 = vperm.xlu0 %239, %v20
    %v241 = vpop.permute.xlu0 %240
    %v243 = vlaneseq
    %v244 = vshrl.u32 %v243, 7
    %v245 = vsub.s32 2, %v244
    %v246 = vrot.slane %v15, %v245
    %v247 = vlaneseq
    %v248 = vshrl.u32 %v247, 7
    %v249 = vsub.s32 6, %v248
    %v250 = vrot.slane %v15, %v249
    %v251 = vlaneseq
    %v252 = vshrl.u32 %v251, 7
    %v253 = vsub.s32 2, %v252
    %v254 = vrot.slane %v16, %v253
    %v255 = vlaneseq
    %v256 = vshrl.u32 %v255, 7
    %v257 = vsub.s32 6, %v256
    %v258 = vrot.slane %v16, %v257
    %v259 = vlaneseq
    %v260 = vshrl.u32 %v259, 7
    %v261 = vsub.s32 2, %v260
    %v262 = vrot.slane %v17, %v261
    %v263 = vlaneseq
    %v264 = vshrl.u32 %v263, 7
    %v265 = vsub.s32 6, %v264
    %v266 = vrot.slane %v17, %v265
    %v267 = vlaneseq
    %v268 = vshrl.u32 %v267, 7
    %v269 = vsub.s32 2, %v268
    %v270 = vrot.slane %v18, %v269
    %v271 = vlaneseq
    %v272 = vshrl.u32 %v271, 7
    %v273 = vsub.s32 6, %v272
    %v274 = vrot.slane %v18, %v273
    %v283 = vlaneseq
    %v284 = vshrl.u32 %v283, 7
    %v285 = vsub.s32 2, %v284
    %v286 = vrot.slane %v246, %v285
    %v287 = vlaneseq
    %v288 = vshrl.u32 %v287, 7
    %v289 = vsub.s32 2, %v288
    %v290 = vrot.slane %v250, %v289
    %v291 = vlaneseq
    %v292 = vshrl.u32 %v291, 7
    %v293 = vsub.s32 2, %v292
    %v294 = vrot.slane %v254, %v293
    %v295 = vlaneseq
    %v296 = vshrl.u32 %v295, 7
    %v297 = vsub.s32 2, %v296
    %v298 = vrot.slane %v258, %v297
    %v299 = vlaneseq
    %v300 = vshrl.u32 %v299, 7
    %v301 = vsub.s32 2, %v300
    %v302 = vrot.slane %v262, %v301
    %v303 = vlaneseq
    %v304 = vshrl.u32 %v303, 7
    %v305 = vsub.s32 2, %v304
    %v306 = vrot.slane %v266, %v305
    %v307 = vlaneseq
    %v308 = vshrl.u32 %v307, 7
    %v309 = vsub.s32 2, %v308
    %v310 = vrot.slane %v270, %v309
    %v311 = vlaneseq
    %v312 = vshrl.u32 %v311, 7
    %v313 = vsub.s32 2, %v312
    %v314 = vrot.slane %v274, %v313
    %v315 = vmul.f32 %v237, %v286
    %v316 = vmul.f32 %v237, %v290
    %v317 = vmul.f32 %v237, %v294
    %v318 = vmul.f32 %v237, %v298
    %v319 = vmul.f32 %v237, %v302
    %v320 = vmul.f32 %v237, %v306
    %v321 = vmul.f32 %v237, %v310
    %v322 = vmul.f32 %v237, %v314
    %v323 = vmul.f32 %v241, %v286
    %v324 = vmul.f32 %v241, %v290
    %v325 = vmul.f32 %v241, %v294
    %v326 = vmul.f32 %v241, %v298
    %v327 = vmul.f32 %v241, %v302
    %v328 = vmul.f32 %v241, %v306
    %v329 = vmul.f32 %v241, %v310
    %v330 = vmul.f32 %v241, %v314
    %v331 = vadd.f32 %v219, %v315
    %v332 = vadd.f32 %v220, %v316
    %v333 = vadd.f32 %v221, %v317
    %v334 = vadd.f32 %v222, %v318
    %v335 = vadd.f32 %v223, %v319
    %v336 = vadd.f32 %v224, %v320
    %v337 = vadd.f32 %v225, %v321
    %v338 = vadd.f32 %v226, %v322
    %v339 = vadd.f32 %v227, %v323
    %v340 = vadd.f32 %v228, %v324
    %v341 = vadd.f32 %v229, %v325
    %v342 = vadd.f32 %v230, %v326
    %v343 = vadd.f32 %v231, %v327
    %v344 = vadd.f32 %v232, %v328
    %v345 = vadd.f32 %v233, %v329
    %v346 = vadd.f32 %v234, %v330
    %v347 = vld [vmem:[%s2] sm:$0xff]
    %v348 = vld [vmem:[%s2 + $0x8] sm:$0xff]
    %350 = vset.pattern.permute.xlu0 0
    %351 = vperm.xlu0 %350, %v347
    %v352 = vpop.permute.xlu0 %351
    %355 = vset.pattern.permute.xlu0 0
    %356 = vperm.xlu0 %355, %v348
    %v357 = vpop.permute.xlu0 %356
    %v359 = vadd.f32 %v331, %v352
    %v360 = vadd.f32 %v332, %v352
    %v361 = vadd.f32 %v333, %v352
    %v362 = vadd.f32 %v334, %v352
    %v363 = vadd.f32 %v335, %v352
    %v364 = vadd.f32 %v336, %v352
    %v365 = vadd.f32 %v337, %v352
    %v366 = vadd.f32 %v338, %v352
    %v367 = vadd.f32 %v339, %v357
    %v368 = vadd.f32 %v340, %v357
    %v369 = vadd.f32 %v341, %v357
    %v370 = vadd.f32 %v342, %v357
    %v371 = vadd.f32 %v343, %v357
    %v372 = vadd.f32 %v344, %v357
    %v373 = vadd.f32 %v345, %v357
    %v374 = vadd.f32 %v346, %v357
    %v375 = vmax.f32 %v359, 0.0
    %v376 = vmax.f32 %v360, 0.0
    %v377 = vmax.f32 %v361, 0.0
    %v378 = vmax.f32 %v362, 0.0
    %v379 = vmax.f32 %v363, 0.0
    %v380 = vmax.f32 %v364, 0.0
    %v381 = vmax.f32 %v365, 0.0
    %v382 = vmax.f32 %v366, 0.0
    %v383 = vmax.f32 %v367, 0.0
    %v384 = vmax.f32 %v368, 0.0
    %v385 = vmax.f32 %v369, 0.0
    %v386 = vmax.f32 %v370, 0.0
    %v387 = vmax.f32 %v371, 0.0
    %v388 = vmax.f32 %v372, 0.0
    %v389 = vmax.f32 %v373, 0.0
    %v390 = vmax.f32 %v374, 0.0
    %v391 = vpack.c.bf16 %v383, %v375
    %v392 = vpack.c.bf16 %v384, %v376
    %v393 = vpack.c.bf16 %v385, %v377
    %v394 = vpack.c.bf16 %v386, %v378
    %v395 = vpack.c.bf16 %v387, %v379
    %v396 = vpack.c.bf16 %v388, %v380
    %v397 = vpack.c.bf16 %v389, %v381
    %v398 = vpack.c.bf16 %v390, %v382
    %v407 = vunpack.c.l.b16 %v391
    %v408 = vunpack.c.l.b16 %v392
    %v409 = vunpack.c.l.b16 %v393
    %v410 = vunpack.c.l.b16 %v394
    %v411 = vunpack.c.l.b16 %v395
    %v412 = vunpack.c.l.b16 %v396
    %v413 = vunpack.c.l.b16 %v397
    %v414 = vunpack.c.l.b16 %v398
    %v415 = vunpack.c.h.b16 %v391
    %v416 = vunpack.c.h.b16 %v392
    %v417 = vunpack.c.h.b16 %v393
    %v418 = vunpack.c.h.b16 %v394
    %v419 = vunpack.c.h.b16 %v395
    %v420 = vunpack.c.h.b16 %v396
    %v421 = vunpack.c.h.b16 %v397
    %v422 = vunpack.c.h.b16 %v398
    %v423 = vpack.c.b16 %v408, %v407
    %v424 = vpack.c.b16 %v410, %v409
    %v425 = vpack.c.b16 %v412, %v411
    %v426 = vpack.c.b16 %v414, %v413
    %v427 = vpack.c.b16 %v416, %v415
    %v428 = vpack.c.b16 %v418, %v417
    %v429 = vpack.c.b16 %v420, %v419
    %v430 = vpack.c.b16 %v422, %v421
    %439 = vst [vmem:[#allocation2] sm:$0xff] %v423
    %440 = vst [vmem:[#allocation2 + $0x8] sm:$0xff] %v424
    %441 = vst [vmem:[#allocation2 + $0x10] sm:$0xff] %v425
    %442 = vst [vmem:[#allocation2 + $0x18] sm:$0xff] %v426
    %443 = vst [vmem:[#allocation2 + $0x20] sm:$0xff] %v427
    %444 = vst [vmem:[#allocation2 + $0x28] sm:$0xff] %v428
    %445 = vst [vmem:[#allocation2 + $0x30] sm:$0xff] %v429
    %446 = vst [vmem:[#allocation2 + $0x38] sm:$0xff] %v430
    // Predicated region
    $region14: #{tpu_custom_call.1} parent=1 // pred_check
      _
    $region15: #{tpu_custom_call.1} parent=1 // pred_check_branch
      %448 = sbr.rel (0) target = $region17
    $region16: #{tpu_custom_call.1} parent=1 // pred_region
      %s450 = ssub.s32 1024, 1024
      %451 = vsyncadd [#allocation3], %s450
      %s452 = sshll.u32 [#allocation2], 4
      %s453 = int_to_ptr.vmem [resolvable:$true] %s452
      %458 = dma.vmem_to_hbm [thread:$0]  %s453, 1024, %s3, [#allocation3], 512, 512, 32
    $region17: #{tpu_custom_call.1} parent=1 // pred_fallthru
      _
    // Predicated region
    $region18: #{tpu_custom_call.1} parent=1 // pred_check
      _
    $region19: #{tpu_custom_call.1} parent=1 // pred_check_branch
      %460 = sbr.rel (0) target = $region21
    $region20: #{tpu_custom_call.1} parent=1 // pred_region
      %461 = dma.done [#allocation3], 1024
    $region21: #{tpu_custom_call.1} parent=1 // pred_fallthru
      _
    %462 = vsyncpa [#allocation3], 1

</llo_original>
